<compile_context>
chip_gen: v5e
topology: v5e:2x2
jax: 0.10.0
libtpu: 0.0.40
codegen_flags: <defaults>
</compile_context>

<pallas_src>
import jax
import jax.numpy as jnp
from jax import lax
from jax.experimental import pallas as pl
from jax.experimental.pallas import tpu as pltpu


def _cdiv(a, b):
    return -(-a // b)


def _round_up(x, m):
    return _cdiv(x, m) * m


def _make_kernel(tk, k_rem):
    """Kernel factory; tk / k_rem are static (Python ints)."""

    def kernel(x_ref, w1_ref, s1_ref, b1_ref, w2_ref, b2_ref, w3_ref, b3_ref,
               o_ref, acc_ref):
        k = pl.program_id(1)

        @pl.when(k == 0)
        def _():
            acc_ref[...] = jnp.zeros_like(acc_ref)

        # In-kernel bf16 cast of the streamed f32 x tile (hidden under the W1 DMA).
        x_tile = x_ref[...].astype(jnp.bfloat16)
        if k_rem:
            # Ragged K tail: zero the out-of-range columns of x.  The matching W1
            # rows are stale int8 (finite after convert), so 0 * finite == 0 and
            # the accumulator stays clean.
            limit = jnp.where(k == pl.num_programs(1) - 1, k_rem, tk)
            col = lax.broadcasted_iota(jnp.int32, (1, tk), 1)
            x_tile = jnp.where(col < limit, x_tile, 0)

        # int8 -> integer-valued bf16 (exact); per-column scale applied in epilogue.
        w1_tile = w1_ref[...].astype(jnp.bfloat16)

        # Layer-1 partial product on the MXU, f32 accumulation.
        acc_ref[...] += jnp.dot(x_tile, w1_tile,
                                preferred_element_type=jnp.float32)

        @pl.when(k == pl.num_programs(1) - 1)
        def _():
            # Epilogue in f32 (v5e VPU has no bf16 path).
            h1 = jnp.maximum(acc_ref[...] * s1_ref[...] + b1_ref[...], 0.0)
            # Layer 2: bf16 MXU matmul, f32 accumulation.
            h2 = jnp.dot(h1.astype(jnp.bfloat16), w2_ref[...],
                         preferred_element_type=jnp.float32)
            h2 = jnp.maximum(h2 + b2_ref[...], 0.0)
            # Layer 3: (H -> 1) projection as a lane reduction instead of a
            # 1-column MXU matmul with a padded weight tile.
            logits = jnp.sum(h2 * w3_ref[...], axis=-1, keepdims=True) + b3_ref[...]
            o_ref[...] = logits.astype(o_ref.dtype)

    return kernel


def domain_discriminator(x, params, *, tm_cap=512, tk_target=2048):
    """x: (N, in_features) float32; params: dict from init_params(). Returns (N, 1) f32."""
    N, F = x.shape
    H = params["b1"].shape[1]
    assert params["w1_q"].shape == (F, H)

    # Batch tile: cover the whole (8-aligned) batch in one tile when it fits, so the
    # dominant W1 stream is read exactly once; otherwise balanced 8-aligned tiles.
    tm_cover = _round_up(N, 8)
    if tm_cover <= _round_up(tm_cap, 8):
        TM = tm_cover
        num_m = 1
    else:
        num_m = _cdiv(N, tm_cap)
        TM = _round_up(_cdiv(N, num_m), 8)
        num_m = _cdiv(N, TM)

    # Reduction (in_features) tile: large, 128-aligned; ragged tail handled in-kernel.
    TK = F if F <= tk_target else max(128, (tk_target // 128) * 128)
    num_k = _cdiv(F, TK)
    k_rem = F % TK

    flops = 2 * N * (F * H + H * H + H)
    bytes_accessed = int(
        N * F * 4                # x stream (f32, read once)
        + num_m * F * H * 1      # int8 W1 stream, revisited once per batch tile
        + H * H * 2              # W2 (bf16)
        + (4 * H + 1) * 4        # scales / biases / w3 row
        + N * 4)                 # output

    # VMEM footprint (double-buffered streams + scratch + epilogue temporaries),
    # with 2x headroom, capped well below v7x's 64 MiB per-core VMEM.
    vmem_bytes = (2 * TM * TK * 4      # x tile, f32, double-buffered
                  + 2 * TK * H * 1     # W1 int8 tile, double-buffered
                  + TK * H * 2         # dequantized bf16 W1 temporary
                  + 2 * H * H * 2      # W2 bf16 (pipeline keeps 2 buffers)
                  + TM * H * 4         # layer-1 accumulator scratch
                  + 5 * TM * H * 4     # epilogue temporaries (rough)
                  + 16 * H * 4)        # biases / scales / w3
    vmem_limit = int(min(max(2 * vmem_bytes, 8 << 20), 48 << 20))

    out = pl.pallas_call(
        _make_kernel(TK, k_rem),
        out_shape=jax.ShapeDtypeStruct((N, 1), jnp.float32),
        grid_spec=pltpu.PrefetchScalarGridSpec(
            num_scalar_prefetch=0,
            grid=(num_m, num_k),                              # reduction axis last
            in_specs=[
                pl.BlockSpec((TM, TK), lambda i, k: (i, k)),  # x tile (streamed, f32)
                pl.BlockSpec((TK, H), lambda i, k: (k, 0)),   # W1 tile (streamed, int8)
                pl.BlockSpec((1, H), lambda i, k: (0, 0)),    # W1 per-column scales
                pl.BlockSpec((1, H), lambda i, k: (0, 0)),    # b1
                pl.BlockSpec((H, H), lambda i, k: (0, 0)),    # W2 (resident, bf16)
                pl.BlockSpec((1, H), lambda i, k: (0, 0)),    # b2
                pl.BlockSpec((1, H), lambda i, k: (0, 0)),    # w3 row
                pl.BlockSpec((1, 1), lambda i, k: (0, 0)),    # b3
            ],
            out_specs=pl.BlockSpec((TM, 1), lambda i, k: (i, 0)),
            scratch_shapes=[pltpu.VMEM((TM, H), jnp.float32)],   # layer-1 accumulator
        ),
        compiler_params=pltpu.CompilerParams(
            dimension_semantics=("parallel", "arbitrary"),
            vmem_limit_bytes=vmem_limit,
        ),
        cost_estimate=pl.CostEstimate(
            flops=int(flops), transcendentals=0, bytes_accessed=bytes_accessed),
    )(x, params["w1_q"], params["w1_scale"], params["b1"], params["w2"],
      params["b2"], params["w3"], params["b3"])

    return out


def init_params(key, in_features, hidden_size):
    """nn.Linear-style init (uniform +-1/sqrt(fan_in)).

    W1 is quantized per-output-column to int8 (+ f32 scales) -- it is the dominant
    HBM stream.  W2 is bf16 (in, out).  The (hidden -> 1) head is a (1, hidden) f32
    row for the lane-reduction layer 3.  Biases are f32.
    """
    ks = jax.random.split(key, 6)

    def lin(kw, kb, fan_in, fan_out):
        bound = 1.0 / jnp.sqrt(fan_in)
        w = jax.random.uniform(kw, (fan_in, fan_out), jnp.float32, -bound, bound)
        b = jax.random.uniform(kb, (1, fan_out), jnp.float32, -bound, bound)
        return w, b

    w1, b1 = lin(ks[0], ks[1], in_features, hidden_size)
    w2, b2 = lin(ks[2], ks[3], hidden_size, hidden_size)
    w3, b3 = lin(ks[4], ks[5], hidden_size, 1)

    # Symmetric per-output-column int8 quantization of W1.
    amax = jnp.max(jnp.abs(w1), axis=0, keepdims=True)
    w1_scale = (jnp.maximum(amax, 1e-8) / 127.0).astype(jnp.float32)
    w1_q = jnp.clip(jnp.round(w1 / w1_scale), -127, 127).astype(jnp.int8)

    return {
        "w1_q": w1_q, "w1_scale": w1_scale, "b1": b1,
        "w2": w2.astype(jnp.bfloat16), "b2": b2,
        "w3": w3.T,   # (1, hidden) f32 row
        "b3": b3,     # (1, 1) f32
    }


def reference(x, p):
    """f32 reference using the same quantized weights / bf16 activations as the kernel."""
    xf = x.astype(jnp.bfloat16).astype(jnp.float32)
    w1 = p["w1_q"].astype(jnp.float32) * p["w1_scale"]
    h1 = jnp.maximum(jnp.dot(xf, w1, precision=lax.Precision.HIGHEST) + p["b1"], 0.0)
    h1 = h1.astype(jnp.bfloat16).astype(jnp.float32)
    w2 = p["w2"].astype(jnp.float32)
    h2 = jnp.maximum(jnp.dot(h1, w2, precision=lax.Precision.HIGHEST) + p["b2"], 0.0)
    return jnp.sum(h2 * p["w3"], axis=-1, keepdims=True) + p["b3"]


if __name__ == "__main__":
    key = jax.random.PRNGKey(0)

    # Check 1: small shapes consistent with the module (in_features = 2048*num_classes
    # scaled down): batch=4, in_features=256, hidden=128.  Single K tile, single M tile.
    N, F, H = 4, 256, 128
    k1, k2, key = jax.random.split(key, 3)
    x = jax.random.normal(k1, (N, F), dtype=jnp.float32)
    params = init_params(k2, F, H)
    out = jax.block_until_ready(domain_discriminator(x, params))
    ref = reference(x, params)
    assert out.shape == (N, 1), out.shape
    assert jnp.allclose(out, ref, atol=2e-2, rtol=2e-2), (out, ref)

    # Check 2: ragged batch (13), ragged K reduction (320 % 128 != 0), multiple batch
    # tiles and multiple K tiles -- exercises the accumulator and masking paths.
    N, F, H = 13, 320, 128
    k1, k2 = jax.random.split(key)
    x = jax.random.normal(k1, (N, F), dtype=jnp.float32)
    params = init_params(k2, F, H)
    out = jax.block_until_ready(
        domain_discriminator(x, params, tm_cap=8, tk_target=128))
    ref = reference(x, params)
    assert out.shape == (N, 1), out.shape
    assert jnp.allclose(out, ref, atol=2e-2, rtol=2e-2), (out, ref)

    print("KERNEL_OK")
</pallas_src>

<mosaic_0001>
module attributes {stable_mosaic.version = 11 : i64} {
  func.func @kernel(%arg0: i32, %arg1: i32, %arg2: memref<8x256xf32, #tpu.memory_space<vmem>>, %arg3: memref<256x128xi8, #tpu.memory_space<vmem>>, %arg4: memref<1x128xf32, #tpu.memory_space<vmem>>, %arg5: memref<1x128xf32, #tpu.memory_space<vmem>>, %arg6: memref<128x128xbf16, #tpu.memory_space<vmem>>, %arg7: memref<1x128xf32, #tpu.memory_space<vmem>>, %arg8: memref<1x128xf32, #tpu.memory_space<vmem>>, %arg9: memref<1x1xf32, #tpu.memory_space<vmem>>, %arg10: memref<8x1xf32, #tpu.memory_space<vmem>>, %arg11: memref<8x128xf32, #tpu.memory_space<vmem>>) attributes {dimension_semantics = [#tpu.dimension_semantics<parallel>, #tpu.dimension_semantics<arbitrary>], iteration_bounds = array<i64: 1, 1>, scalar_prefetch = 0 : i64, scratch_operands = 1 : i64, tpu.core_type = #tpu.core_type<tc>, window_params = [{transform_indices = @transform_0, window_bounds = array<i64: 8, 256>}, {transform_indices = @transform_1, window_bounds = array<i64: 256, 128>}, {pipeline_mode = #tpu.pipeline_mode<synchronous>, transform_indices = @transform_2, window_bounds = array<i64: 1, 128>}, {pipeline_mode = #tpu.pipeline_mode<synchronous>, transform_indices = @transform_3, window_bounds = array<i64: 1, 128>}, {pipeline_mode = #tpu.pipeline_mode<synchronous>, transform_indices = @transform_4, window_bounds = array<i64: 128, 128>}, {pipeline_mode = #tpu.pipeline_mode<synchronous>, transform_indices = @transform_5, window_bounds = array<i64: 1, 128>}, {pipeline_mode = #tpu.pipeline_mode<synchronous>, transform_indices = @transform_6, window_bounds = array<i64: 1, 128>}, {pipeline_mode = #tpu.pipeline_mode<synchronous>, transform_indices = @transform_7, window_bounds = array<i64: 1, 1>}, {transform_indices = @transform_8, window_bounds = array<i64: 8, 1>}]} {
    %c0_i32 = arith.constant 0 : i32
    %0 = arith.cmpi eq, %arg1, %c0_i32 : i32
    %1 = arith.extui %0 : i1 to i32
    %c0_i32_0 = arith.constant 0 : i32
    %2 = arith.cmpi ne, %1, %c0_i32_0 : i32
    scf.if %2 {
      %cst_10 = arith.constant 0.000000e+00 : f32
      %14 = vector.broadcast %cst_10 : f32 to vector<8x128xf32>
      %c0_11 = arith.constant 0 : index
      %c0_12 = arith.constant 0 : index
      %15 = vector.load %arg11[%c0_11, %c0_12] : memref<8x128xf32, #tpu.memory_space<vmem>>, vector<8x128xf32>
      tpu.vector_store %arg11[%c0_11, %c0_12], %14 {strides = array<i32>} : memref<8x128xf32, #tpu.memory_space<vmem>>, vector<8x128xf32>,
    } else {
    }
    %c0 = arith.constant 0 : index
    %c0_1 = arith.constant 0 : index
    %3 = vector.load %arg2[%c0, %c0_1] : memref<8x256xf32, #tpu.memory_space<vmem>>, vector<8x256xf32>
    %4 = arith.truncf %3 : vector<8x256xf32> to vector<8x256xbf16>
    %c0_2 = arith.constant 0 : index
    %c0_3 = arith.constant 0 : index
    %5 = vector.load %arg3[%c0_2, %c0_3] : memref<256x128xi8, #tpu.memory_space<vmem>>, vector<256x128xi8>
    %6 = arith.sitofp %5 : vector<256x128xi8> to vector<256x128xbf16>
    %c0_4 = arith.constant 0 : index
    %c0_5 = arith.constant 0 : index
    %7 = vector.load %arg11[%c0_4, %c0_5] : memref<8x128xf32, #tpu.memory_space<vmem>>, vector<8x128xf32>
    %cst = arith.constant dense<0.000000e+00> : vector<8x128xf32>
    %8 = tpu.matmul %4, %6, %cst {dimension_numbers = #tpu.dot_dimension_numbers<[1], [0], [0], [1], [0, 0, 1, 1], [], []>} : vector<8x256xbf16>, vector<256x128xbf16>, vector<8x128xf32> -> vector<8x128xf32>
    %9 = arith.addf %7, %8 : vector<8x128xf32>
    %c0_6 = arith.constant 0 : index
    %c0_7 = arith.constant 0 : index
    %10 = vector.load %arg11[%c0_6, %c0_7] : memref<8x128xf32, #tpu.memory_space<vmem>>, vector<8x128xf32>
    tpu.vector_store %arg11[%c0_6, %c0_7], %9 {strides = array<i32>} : memref<8x128xf32, #tpu.memory_space<vmem>>, vector<8x128xf32>,
    %c0_i32_8 = arith.constant 0 : i32
    %11 = arith.cmpi eq, %arg1, %c0_i32_8 : i32
    %12 = arith.extui %11 : i1 to i32
    %c0_i32_9 = arith.constant 0 : i32
    %13 = arith.cmpi ne, %12, %c0_i32_9 : i32
    scf.if %13 {
      %c0_10 = arith.constant 0 : index
      %c0_11 = arith.constant 0 : index
      %14 = vector.load %arg11[%c0_10, %c0_11] : memref<8x128xf32, #tpu.memory_space<vmem>>, vector<8x128xf32>
      %c0_12 = arith.constant 0 : index
      %c0_13 = arith.constant 0 : index
      %15 = vector.load %arg4[%c0_12, %c0_13] : memref<1x128xf32, #tpu.memory_space<vmem>>, vector<1x128xf32>
      %16 = vector.broadcast %15 : vector<1x128xf32> to vector<8x128xf32>
      %17 = arith.mulf %14, %16 : vector<8x128xf32>
      %c0_14 = arith.constant 0 : index
      %c0_15 = arith.constant 0 : index
      %18 = vector.load %arg5[%c0_14, %c0_15] : memref<1x128xf32, #tpu.memory_space<vmem>>, vector<1x128xf32>
      %19 = vector.broadcast %18 : vector<1x128xf32> to vector<8x128xf32>
      %20 = arith.addf %17, %19 : vector<8x128xf32>
      %cst_16 = arith.constant 0.000000e+00 : f32
      %21 = vector.broadcast %cst_16 : f32 to vector<8x128xf32>
      %22 = arith.maximumf %20, %21 : vector<8x128xf32>
      %23 = arith.truncf %22 : vector<8x128xf32> to vector<8x128xbf16>
      %c0_17 = arith.constant 0 : index
      %c0_18 = arith.constant 0 : index
      %24 = vector.load %arg6[%c0_17, %c0_18] : memref<128x128xbf16, #tpu.memory_space<vmem>>, vector<128x128xbf16>
      %cst_19 = arith.constant dense<0.000000e+00> : vector<8x128xf32>
      %25 = tpu.matmul %23, %24, %cst_19 {dimension_numbers = #tpu.dot_dimension_numbers<[1], [0], [0], [1], [0, 0, 1, 1], [], []>} : vector<8x128xbf16>, vector<128x128xbf16>, vector<8x128xf32> -> vector<8x128xf32>
      %c0_20 = arith.constant 0 : index
      %c0_21 = arith.constant 0 : index
      %26 = vector.load %arg7[%c0_20, %c0_21] : memref<1x128xf32, #tpu.memory_space<vmem>>, vector<1x128xf32>
      %27 = vector.broadcast %26 : vector<1x128xf32> to vector<8x128xf32>
      %28 = arith.addf %25, %27 : vector<8x128xf32>
      %cst_22 = arith.constant 0.000000e+00 : f32
      %29 = vector.broadcast %cst_22 : f32 to vector<8x128xf32>
      %30 = arith.maximumf %28, %29 : vector<8x128xf32>
      %c0_23 = arith.constant 0 : index
      %c0_24 = arith.constant 0 : index
      %31 = vector.load %arg8[%c0_23, %c0_24] : memref<1x128xf32, #tpu.memory_space<vmem>>, vector<1x128xf32>
      %32 = vector.broadcast %31 : vector<1x128xf32> to vector<8x128xf32>
      %33 = arith.mulf %30, %32 : vector<8x128xf32>
      %cst_25 = arith.constant dense<0.000000e+00> : vector<8xf32>
      %34 = vector.multi_reduction <add>, %33, %cst_25 [1] : vector<8x128xf32> to vector<8xf32>
      %35 = vector.shape_cast %34 : vector<8xf32> to vector<8x1xf32>
      %c0_26 = arith.constant 0 : index
      %c0_27 = arith.constant 0 : index
      %36 = vector.load %arg9[%c0_26, %c0_27] : memref<1x1xf32, #tpu.memory_space<vmem>>, vector<1x1xf32>
      %37 = vector.broadcast %36 : vector<1x1xf32> to vector<8x1xf32>
      %38 = arith.addf %35, %37 : vector<8x1xf32>
      %c0_28 = arith.constant 0 : index
      %c0_29 = arith.constant 0 : index
      %39 = vector.load %arg10[%c0_28, %c0_29] : memref<8x1xf32, #tpu.memory_space<vmem>>, vector<8x1xf32>
      tpu.vector_store %arg10[%c0_28, %c0_29], %38 {strides = array<i32>} : memref<8x1xf32, #tpu.memory_space<vmem>>, vector<8x1xf32>,
    } else {
    }
    return
  }
  func.func @transform_0(%arg0: i32, %arg1: i32) -> (i32, i32) {
    %c0_i32 = arith.constant 0 : i32
    return %arg0, %arg1 : i32, i32
  }
  func.func @transform_1(%arg0: i32, %arg1: i32) -> (i32, i32) {
    %c0_i32 = arith.constant 0 : i32
    %c0_i32_0 = arith.constant 0 : i32
    return %arg1, %c0_i32 : i32, i32
  }
  func.func @transform_2(%arg0: i32, %arg1: i32) -> (i32, i32) {
    %c0_i32 = arith.constant 0 : i32
    %c0_i32_0 = arith.constant 0 : i32
    %c0_i32_1 = arith.constant 0 : i32
    return %c0_i32, %c0_i32_0 : i32, i32
  }
  func.func @transform_3(%arg0: i32, %arg1: i32) -> (i32, i32) {
    %c0_i32 = arith.constant 0 : i32
    %c0_i32_0 = arith.constant 0 : i32
    %c0_i32_1 = arith.constant 0 : i32
    return %c0_i32, %c0_i32_0 : i32, i32
  }
  func.func @transform_4(%arg0: i32, %arg1: i32) -> (i32, i32) {
    %c0_i32 = arith.constant 0 : i32
    %c0_i32_0 = arith.constant 0 : i32
    %c0_i32_1 = arith.constant 0 : i32
    return %c0_i32, %c0_i32_0 : i32, i32
  }
  func.func @transform_5(%arg0: i32, %arg1: i32) -> (i32, i32) {
    %c0_i32 = arith.constant 0 : i32
    %c0_i32_0 = arith.constant 0 : i32
    %c0_i32_1 = arith.constant 0 : i32
    return %c0_i32, %c0_i32_0 : i32, i32
  }
  func.func @transform_6(%arg0: i32, %arg1: i32) -> (i32, i32) {
    %c0_i32 = arith.constant 0 : i32
    %c0_i32_0 = arith.constant 0 : i32
    %c0_i32_1 = arith.constant 0 : i32
    return %c0_i32, %c0_i32_0 : i32, i32
  }
  func.func @transform_7(%arg0: i32, %arg1: i32) -> (i32, i32) {
    %c0_i32 = arith.constant 0 : i32
    %c0_i32_0 = arith.constant 0 : i32
    %c0_i32_1 = arith.constant 0 : i32
    return %c0_i32, %c0_i32_0 : i32, i32
  }
  func.func @transform_8(%arg0: i32, %arg1: i32) -> (i32, i32) {
    %c0_i32 = arith.constant 0 : i32
    %c0_i32_0 = arith.constant 0 : i32
    return %arg0, %c0_i32 : i32, i32
  }
}

</mosaic_0001>

<llo_original>
// kernel: tpu_custom_call.1
$region0: #{tpu_custom_call.1}
  #allocation0 [shape = 'u32[]', space=smem, size = 0x4, offset = 0x4, fixed_abs, tag = 'smem constant byte address 0x4 - core index']
  #allocation1 [shape = 'u32[72,128]{1,0:T(1,128)}', space=vmem, size = 0x9000, scoped, tag = 'internal scratch']
  #allocation2 [shape = 'f32[8,128]{1,0:T(8,128)}', space=vmem, size = 0x1000, scoped, tag = 'scratch operand']
  #allocation3 [shape = 'f32[1,1]{1,0:T(1,128)S(1)}', space=vmem, size = 0x200, scoped, tag = 'scoped memory for tpu_custom_call.1']
  %s0 = inlined_call_operand.hbm [shape: f32[4,256], index: 0, kind: input, shape index: {}]
  %s1 = inlined_call_operand.hbm [shape: s8[256,128], index: 1, kind: input, shape index: {}]
  %s2 = inlined_call_operand.vmem [shape: f32[1,128], index: 2, kind: input, shape index: {}]
  %s3 = inlined_call_operand.vmem [shape: f32[1,128], index: 3, kind: input, shape index: {}]
  %s4 = inlined_call_operand.hbm [shape: bf16[128,128], index: 4, kind: input, shape index: {}]
  %s5 = inlined_call_operand.vmem [shape: f32[1,128], index: 5, kind: input, shape index: {}]
  %s6 = inlined_call_operand.vmem [shape: f32[1,128], index: 6, kind: input, shape index: {}]
  %s7 = inlined_call_operand.<no memory space> [shape: f32[1,1], index: 7, kind: input, shape index: {}]
  %s8 = inlined_call_operand.vmem [shape: f32[4,1], index: 8, kind: output, shape index: {}]
  %s9 = sld [smem:[#allocation0]]
  $region92: #{tpu_custom_call.1} parent=0
    _
  %s11 = ssub.s32 1, %s9
  %s12 = scalar_select 0, %s11, %s9
  %v13 = vstv %s7
  %14 = vst [vmem:[#allocation3] sm:$0x1] %v13
  $region1: #{tpu_custom_call.1} parent=0
    #allocation4 [shape = 'u8[8192]{0}', space=vmem, size = 0x2000, scoped, tag = 'input window, operand 0, single buffered']
    #allocation5 [shape = 's32[1]{0}', space=sflag, size = 0x4, scoped, tag = 'scoped memory for tpu_custom_call.1']
    #allocation6 [shape = 'u8[32768]{0}', space=vmem, size = 0x8000, scoped, tag = 'input window, operand 1, single buffered']
    #allocation7 [shape = 's32[1]{0}', space=sflag, size = 0x4, scoped, tag = 'scoped memory for tpu_custom_call.1']
    #allocation8 [shape = 'u8[32768]{0}', space=vmem, size = 0x8000, scoped, tag = 'input window, operand 4, single buffered']
    #allocation9 [shape = 'u8[4096]{0}', space=vmem, size = 0x1000, scoped, tag = 'output window, operand 0, single buffered']
    %15 = vsyncpa [#allocation5], 0
    %16 = vsyncpa [#allocation7], 0
    // Predicated region
    $region2: #{tpu_custom_call.1} parent=1 // pred_check
      _
    $region3: #{tpu_custom_call.1} parent=1 // pred_check_branch
      %18 = sbr.rel (0) target = $region5
    $region4: #{tpu_custom_call.1} parent=1 // pred_region
      %20 = vsyncadd [#allocation5], 128
      %s21 = sshll.u32 %s0, 4
      %s22 = int_to_ptr.hbm [resolvable:$true] %s21
      %s23 = sshll.u32 [#allocation4], 4
      %s24 = int_to_ptr.vmem [resolvable:$true] %s23
      %29 = dma.hbm_to_vmem [thread:$0]  %s22, 128, %s24, [#allocation5], 128, 128, 8
    $region5: #{tpu_custom_call.1} parent=1 // pred_fallthru
      _
    // Predicated region
    $region6: #{tpu_custom_call.1} parent=1 // pred_check
      _
    $region7: #{tpu_custom_call.1} parent=1 // pred_check_branch
      %31 = sbr.rel (0) target = $region9
    $region8: #{tpu_custom_call.1} parent=1 // pred_region
      %33 = vsyncadd [#allocation7], 0
      %s34 = sshll.u32 %s1, 4
      %s35 = int_to_ptr.hbm [resolvable:$true] %s34
      %s36 = sshll.u32 [#allocation6], 4
      %s37 = int_to_ptr.vmem [resolvable:$true] %s36
      %42 = dma.hbm_to_vmem [thread:$0]  %s35, 1024, %s37, [#allocation7], 128, 128, 8
    $region9: #{tpu_custom_call.1} parent=1 // pred_fallthru
      _
    // Predicated region
    $region10: #{tpu_custom_call.1} parent=1 // pred_check
      _
    $region11: #{tpu_custom_call.1} parent=1 // pred_check_branch
      %44 = sbr.rel (0) target = $region13
    $region12: #{tpu_custom_call.1} parent=1 // pred_region
      _
    $region13: #{tpu_custom_call.1} parent=1 // pred_fallthru
      _
    // Predicated region
    $region14: #{tpu_custom_call.1} parent=1 // pred_check
      _
    $region15: #{tpu_custom_call.1} parent=1 // pred_check_branch
      %46 = sbr.rel (0) target = $region17
    $region16: #{tpu_custom_call.1} parent=1 // pred_region
      _
    $region17: #{tpu_custom_call.1} parent=1 // pred_fallthru
      _
    // Predicated region
    $region18: #{tpu_custom_call.1} parent=1 // pred_check
      _
    $region19: #{tpu_custom_call.1} parent=1 // pred_check_branch
      %48 = sbr.rel (0) target = $region21
    $region20: #{tpu_custom_call.1} parent=1 // pred_region
      %50 = vsyncadd [#allocation7], 0
      %s51 = sshll.u32 %s4, 4
      %s52 = int_to_ptr.hbm [resolvable:$true] %s51
      %s53 = sshll.u32 [#allocation8], 4
      %s54 = int_to_ptr.vmem [resolvable:$true] %s53
      %59 = dma.hbm_to_vmem [thread:$0]  %s52, 1024, %s54, [#allocation7], 64, 64, 4
    $region21: #{tpu_custom_call.1} parent=1 // pred_fallthru
      _
    // Predicated region
    $region22: #{tpu_custom_call.1} parent=1 // pred_check
      _
    $region23: #{tpu_custom_call.1} parent=1 // pred_check_branch
      %61 = sbr.rel (0) target = $region25
    $region24: #{tpu_custom_call.1} parent=1 // pred_region
      _
    $region25: #{tpu_custom_call.1} parent=1 // pred_fallthru
      _
    // Predicated region
    $region26: #{tpu_custom_call.1} parent=1 // pred_check
      _
    $region27: #{tpu_custom_call.1} parent=1 // pred_check_branch
      %63 = sbr.rel (0) target = $region29
    $region28: #{tpu_custom_call.1} parent=1 // pred_region
      _
    $region29: #{tpu_custom_call.1} parent=1 // pred_fallthru
      _
    // Predicated region
    $region30: #{tpu_custom_call.1} parent=1 // pred_check
      _
    $region31: #{tpu_custom_call.1} parent=1 // pred_check_branch
      %65 = sbr.rel (0) target = $region33
    $region32: #{tpu_custom_call.1} parent=1 // pred_region
      _
    $region33: #{tpu_custom_call.1} parent=1 // pred_fallthru
      _
    // Predicated region
    $region34: #{tpu_custom_call.1} parent=1 // pred_check
      _
    $region35: #{tpu_custom_call.1} parent=1 // pred_check_branch
      %67 = sbr.rel (0) target = $region37
    $region36: #{tpu_custom_call.1} parent=1 // pred_region
      %69 = dma.done [#allocation5], 256
    $region37: #{tpu_custom_call.1} parent=1 // pred_fallthru
      _
    // Predicated region
    $region38: #{tpu_custom_call.1} parent=1 // pred_check
      _
    $region39: #{tpu_custom_call.1} parent=1 // pred_check_branch
      %71 = sbr.rel (0) target = $region41
    $region40: #{tpu_custom_call.1} parent=1 // pred_region
      %73 = dma.done [#allocation7], 1024
    $region41: #{tpu_custom_call.1} parent=1 // pred_fallthru
      _
    // Predicated region
    $region42: #{tpu_custom_call.1} parent=1 // pred_check
      _
    $region43: #{tpu_custom_call.1} parent=1 // pred_check_branch
      %75 = sbr.rel (0) target = $region45
    $region44: #{tpu_custom_call.1} parent=1 // pred_region
      %77 = dma.done [#allocation7], 1024
    $region45: #{tpu_custom_call.1} parent=1 // pred_fallthru
      _
    %p78 = scmp.eq.s32.totalorder 0, 0
    // Predicated region
    $region46: #{tpu_custom_call.1} parent=1 // pred_check
      %p79 = pneg %p78
    $region47: #{tpu_custom_call.1} parent=1 // pred_check_branch
      %81 = sbr.rel (%p79) target = $region49
    $region48: #{tpu_custom_call.1} parent=1 // pred_region
      %82 = vst [vmem:[#allocation2] sm:$0xff] 0.0
    $region49: #{tpu_custom_call.1} parent=1 // pred_fallthru
      _
    %v83 = vld [vmem:[#allocation4] sm:$0xff]
    %v84 = vld [vmem:[#allocation4 + $0x8] sm:$0xff]
    %87 = vst [vmem:[#allocation1] ss:$2 sm:$0xff] %v83
    %s88 = scalar_lea.vmem [#allocation1], 1
    %89 = vst [vmem:[%s88] ss:$2 sm:$0xff] %v84
    %v90 = vld.sshfl [vmem:[#allocation1] sm:$0xff pattern:$0x75316420]
    %v91 = vld.sshfl [vmem:[#allocation1 + $0x8] sm:$0xff pattern:$0x75316420]
    %v94 = vpack.c.bf16 %v90, %v90
    %v95 = vpack.c.bf16 %v91, %v91
    %v96 = vld [vmem:[#allocation6] sm:$0xff]
    %v97 = vld [vmem:[#allocation6 + $0x8] sm:$0xff]
    %v98 = vld [vmem:[#allocation6 + $0x10] sm:$0xff]
    %v99 = vld [vmem:[#allocation6 + $0x18] sm:$0xff]
    %v100 = vld [vmem:[#allocation6 + $0x20] sm:$0xff]
    %v101 = vld [vmem:[#allocation6 + $0x28] sm:$0xff]
    %v102 = vld [vmem:[#allocation6 + $0x30] sm:$0xff]
    %v103 = vld [vmem:[#allocation6 + $0x38] sm:$0xff]
    %v104 = vunpack.c.0.s8 %v96
    %v105 = vunpack.c.1.s8 %v96
    %v106 = vunpack.c.2.s8 %v96
    %v107 = vunpack.c.3.s8 %v96
    %v108 = vunpack.c.0.s8 %v97
    %v109 = vunpack.c.1.s8 %v97
    %v110 = vunpack.c.2.s8 %v97
    %v111 = vunpack.c.3.s8 %v97
    %v112 = vunpack.c.0.s8 %v98
    %v113 = vunpack.c.1.s8 %v98
    %v114 = vunpack.c.2.s8 %v98
    %v115 = vunpack.c.3.s8 %v98
    %v116 = vunpack.c.0.s8 %v99
    %v117 = vunpack.c.1.s8 %v99
    %v118 = vunpack.c.2.s8 %v99
    %v119 = vunpack.c.3.s8 %v99
    %v120 = vunpack.c.0.s8 %v100
    %v121 = vunpack.c.1.s8 %v100
    %v122 = vunpack.c.2.s8 %v100
    %v123 = vunpack.c.3.s8 %v100
    %v124 = vunpack.c.0.s8 %v101
    %v125 = vunpack.c.1.s8 %v101
    %v126 = vunpack.c.2.s8 %v101
    %v127 = vunpack.c.3.s8 %v101
    %v128 = vunpack.c.0.s8 %v102
    %v129 = vunpack.c.1.s8 %v102
    %v130 = vunpack.c.2.s8 %v102
    %v131 = vunpack.c.3.s8 %v102
    %v132 = vunpack.c.0.s8 %v103
    %v133 = vunpack.c.1.s8 %v103
    %v134 = vunpack.c.2.s8 %v103
    %v135 = vunpack.c.3.s8 %v103
    %v136 = vcvt.s32.f32 %v104
    %v137 = vcvt.s32.f32 %v105
    %v138 = vcvt.s32.f32 %v106
    %v139 = vcvt.s32.f32 %v107
    %v140 = vcvt.s32.f32 %v108
    %v141 = vcvt.s32.f32 %v109
    %v142 = vcvt.s32.f32 %v110
    %v143 = vcvt.s32.f32 %v111
    %v144 = vcvt.s32.f32 %v112
    %v145 = vcvt.s32.f32 %v113
    %v146 = vcvt.s32.f32 %v114
    %v147 = vcvt.s32.f32 %v115
    %v148 = vcvt.s32.f32 %v116
    %v149 = vcvt.s32.f32 %v117
    %v150 = vcvt.s32.f32 %v118
    %v151 = vcvt.s32.f32 %v119
    %v152 = vcvt.s32.f32 %v120
    %v153 = vcvt.s32.f32 %v121
    %v154 = vcvt.s32.f32 %v122
    %v155 = vcvt.s32.f32 %v123
    %v156 = vcvt.s32.f32 %v124
    %v157 = vcvt.s32.f32 %v125
    %v158 = vcvt.s32.f32 %v126
    %v159 = vcvt.s32.f32 %v127
    %v160 = vcvt.s32.f32 %v128
    %v161 = vcvt.s32.f32 %v129
    %v162 = vcvt.s32.f32 %v130
    %v163 = vcvt.s32.f32 %v131
    %v164 = vcvt.s32.f32 %v132
    %v165 = vcvt.s32.f32 %v133
    %v166 = vcvt.s32.f32 %v134
    %v167 = vcvt.s32.f32 %v135
    %v168 = vpack.c.bf16 %v137, %v136
    %v169 = vpack.c.bf16 %v139, %v138
    %v170 = vpack.c.bf16 %v141, %v140
    %v171 = vpack.c.bf16 %v143, %v142
    %v172 = vpack.c.bf16 %v145, %v144
    %v173 = vpack.c.bf16 %v147, %v146
    %v174 = vpack.c.bf16 %v149, %v148
    %v175 = vpack.c.bf16 %v151, %v150
    %v176 = vpack.c.bf16 %v153, %v152
    %v177 = vpack.c.bf16 %v155, %v154
    %v178 = vpack.c.bf16 %v157, %v156
    %v179 = vpack.c.bf16 %v159, %v158
    %v180 = vpack.c.bf16 %v161, %v160
    %v181 = vpack.c.bf16 %v163, %v162
    %v182 = vpack.c.bf16 %v165, %v164
    %v183 = vpack.c.bf16 %v167, %v166
    %v184 = vld [vmem:[#allocation2] sm:$0xff]
    %185 = vmatpush.bf16.msra.mxu0 %v175
    %186 = vmatpush.bf16.msra.mxu0 %v174
    %187 = vmatpush.bf16.msra.mxu0 %v173
    %188 = vmatpush.bf16.msra.mxu0 %v172
    %189 = vmatpush.bf16.msra.mxu0 %v171
    %190 = vmatpush.bf16.msra.mxu0 %v170
    %191 = vmatpush.bf16.msra.mxu0 %v169
    %192 = vmatpush.bf16.msra.mxu0 %v168
    %193 = vmatmul.bf16.gmra.mxu0 %v94
    %v194 = vpop.f32.mrf.mxu0
    %v195 = vadd.f32 0.0, %v194
    %v196 = vpop.f32.mrf.mxu0
    %197 = vdwg.mxu0
    %198 = vmatpush.bf16.msra.mxu0 %v183
    %199 = vmatpush.bf16.msra.mxu0 %v182
    %200 = vmatpush.bf16.msra.mxu0 %v181
    %201 = vmatpush.bf16.msra.mxu0 %v180
    %202 = vmatpush.bf16.msra.mxu0 %v179
    %203 = vmatpush.bf16.msra.mxu0 %v178
    %204 = vmatpush.bf16.msra.mxu0 %v177
    %205 = vmatpush.bf16.msra.mxu0 %v176
    %206 = vmatmul.bf16.gmra.mxu0 %v95
    %v207 = vpop.f32.mrf.mxu0
    %v208 = vadd.f32 %v195, %v207
    %v209 = vpop.f32.mrf.mxu0
    %210 = vdwg.mxu0
    %v211 = vadd.f32 %v184, %v208
    %212 = vst [vmem:[#allocation2] sm:$0xff] %v211
    // Predicated region
    $region50: #{tpu_custom_call.1} parent=1 // pred_check
      %p213 = pneg %p78
    $region51: #{tpu_custom_call.1} parent=1 // pred_check_branch
      %215 = sbr.rel (%p213) target = $region53
    $region52: #{tpu_custom_call.1} parent=1 // pred_region
      %v216 = vld [vmem:[#allocation2] sm:$0xff]
      %v217 = vld [vmem:[%s2] sm:$0x1]
      %v219 = vperm.slane %v217, 0
      %v221 = vmul.f32 %v216, %v219
      %v222 = vld [vmem:[%s3] sm:$0x1]
      %v224 = vperm.slane %v222, 0
      %v226 = vadd.f32 %v221, %v224
      %v227 = vmax.f32 %v226, 0.0
      %v228 = vpack.c.bf16 %v227, %v227
      %v229 = vld [vmem:[#allocation8] sm:$0xf]
      %v230 = vld [vmem:[#allocation8 + $0x4] sm:$0xf]
      %v231 = vld [vmem:[#allocation8 + $0x8] sm:$0xf]
      %v232 = vld [vmem:[#allocation8 + $0xc] sm:$0xf]
      %v233 = vld [vmem:[#allocation8 + $0x10] sm:$0xf]
      %v234 = vld [vmem:[#allocation8 + $0x14] sm:$0xf]
      %v235 = vld [vmem:[#allocation8 + $0x18] sm:$0xf]
      %v236 = vld [vmem:[#allocation8 + $0x1c] sm:$0xf]
      %v237 = vld [vmem:[#allocation8 + $0x20] sm:$0xf]
      %v238 = vld [vmem:[#allocation8 + $0x24] sm:$0xf]
      %v239 = vld [vmem:[#allocation8 + $0x28] sm:$0xf]
      %v240 = vld [vmem:[#allocation8 + $0x2c] sm:$0xf]
      %v241 = vld [vmem:[#allocation8 + $0x30] sm:$0xf]
      %v242 = vld [vmem:[#allocation8 + $0x34] sm:$0xf]
      %v243 = vld [vmem:[#allocation8 + $0x38] sm:$0xf]
      %v244 = vld [vmem:[#allocation8 + $0x3c] sm:$0xf]
      %v245 = vld [vmem:[%s5] sm:$0x1]
      %v247 = vperm.slane %v245, 0
      %v265 = vunpack.c.l.b16 %v229
      %v266 = vunpack.c.l.b16 %v230
      %v267 = vunpack.c.l.b16 %v231
      %v268 = vunpack.c.l.b16 %v232
      %v269 = vunpack.c.l.b16 %v233
      %v270 = vunpack.c.l.b16 %v234
      %v271 = vunpack.c.l.b16 %v235
      %v272 = vunpack.c.l.b16 %v236
      %v273 = vunpack.c.l.b16 %v237
      %v274 = vunpack.c.l.b16 %v238
      %v275 = vunpack.c.l.b16 %v239
      %v276 = vunpack.c.l.b16 %v240
      %v277 = vunpack.c.l.b16 %v241
      %v278 = vunpack.c.l.b16 %v242
      %v279 = vunpack.c.l.b16 %v243
      %v280 = vunpack.c.l.b16 %v244
      %v281 = vpack.c.b16 %v266, %v265
      %v282 = vpack.c.b16 %v268, %v267
      %v283 = vpack.c.b16 %v270, %v269
      %v284 = vpack.c.b16 %v272, %v271
      %v285 = vpack.c.b16 %v274, %v273
      %v286 = vpack.c.b16 %v276, %v275
      %v287 = vpack.c.b16 %v278, %v277
      %v288 = vpack.c.b16 %v280, %v279
      %297 = vmatpush.bf16.msra.mxu0 %v288
      %298 = vmatpush.bf16.msra.mxu0 %v287
      %299 = vmatpush.bf16.msra.mxu0 %v286
      %300 = vmatpush.bf16.msra.mxu0 %v285
      %301 = vmatpush.bf16.msra.mxu0 %v284
      %302 = vmatpush.bf16.msra.mxu0 %v283
      %303 = vmatpush.bf16.msra.mxu0 %v282
      %304 = vmatpush.bf16.msra.mxu0 %v281
      %305 = vmatmul.bf16.gmra.mxu0 %v228
      %v306 = vpop.f32.mrf.mxu0
      %v307 = vadd.f32 %v247, %v306
      %v308 = vpop.f32.mrf.mxu0
      %309 = vdwg.mxu0
      %v310 = vmax.f32 %v307, 0.0
      %v311 = vld [vmem:[%s6] sm:$0x1]
      %v313 = vperm.slane %v311, 0
      %v315 = vmul.f32 %v310, %v313
      %316 = vadd.xlane.f32.xlu0 %v315
      %v317 = vpop.xlane.xlu0 %316
      %v318 = vld [vmem:[#allocation3] sm:$0x1]
      %v320 = vperm.slane %v318, 0
      %v322 = vadd.f32 %v317, %v320
      %vm323 = vcmask 7168
      %324 = vst.msk [vmem:[#allocation9] sm:$0xff] %vm323, %v322
    $region53: #{tpu_custom_call.1} parent=1 // pred_fallthru
      _
    // Predicated region
    $region54: #{tpu_custom_call.1} parent=1 // pred_check
      _
    $region55: #{tpu_custom_call.1} parent=1 // pred_check_branch
      %326 = sbr.rel (0) target = $region57
    $region56: #{tpu_custom_call.1} parent=1 // pred_region
      // Predicated region
      $region58: #{tpu_custom_call.1} parent=56 // pred_check
        _
      $region59: #{tpu_custom_call.1} parent=56 // pred_check_branch
        %328 = sbr.rel (0) target = $region61
      $region60: #{tpu_custom_call.1} parent=56 // pred_region
        // Predicated region
        $region62: #{tpu_custom_call.1} parent=60 // pred_check
          _
        $region63: #{tpu_custom_call.1} parent=60 // pred_check_branch
          %330 = sbr.rel target = $region65
        $region64: #{tpu_custom_call.1} parent=60 // pred_region
          // Predicated region
          $region77: #{tpu_custom_call.1} parent=64 // pred_check
            _
          $region78: #{tpu_custom_call.1} parent=64 // pred_check_branch
            %346 = sbr.rel (0) target = $region80
          $region79: #{tpu_custom_call.1} parent=64 // pred_region
            %s348 = ssub.s32 16, 1
            loop: start=0, step=1, limit=1
            $region81: #{tpu_custom_call.1} parent=79 // loop_pre_header
              _
            $region82: #{tpu_custom_call.1} parent=79 // loop_header
              %s350 = sphi 0, %s354
              %p351 = scmp.ge.s32.totalorder %s350, 1
              %s355 = sphi [#allocation9], [#allocation9]
              %s356 = sphi %s8, %s8
            $region83: #{tpu_custom_call.1} parent=79 // loop_header_branch
              %353 = sbr.rel (%p351) target = $region87
            $region84: #{tpu_custom_call.1} parent=79 // loop_body
              %v357 = vld [vmem:[%s355] sm:%s348]
              %358 = vst [vmem:[%s356] sm:%s348] %v357
            $region85: #{tpu_custom_call.1} parent=79 // loop_footer
              %s354 = sadd.s32 1, %s350
            $region86: #{tpu_custom_call.1} parent=79 // loop_footer_branch
              %349 = sbr.rel target = $region82
            $region87: #{tpu_custom_call.1} parent=79 // loop_exit
              _
          $region80: #{tpu_custom_call.1} parent=64 // pred_fallthru
            _
        $region65: #{tpu_custom_call.1} parent=60 // pred_fallthru
          _
        // Predicated region
        $region66: #{tpu_custom_call.1} parent=60 // pred_check
          _
        $region67: #{tpu_custom_call.1} parent=60 // pred_check_branch
          %332 = sbr.rel (0) target = $region69
        $region68: #{tpu_custom_call.1} parent=60 // pred_region
          %s334 = ssub.s32 16, 1
          loop: start=0, step=1, limit=1
          $region70: #{tpu_custom_call.1} parent=68 // loop_pre_header
            _
          $region71: #{tpu_custom_call.1} parent=68 // loop_header
            %s336 = sphi 0, %s340
            %p337 = scmp.ge.s32.totalorder %s336, 1
            %s341 = sphi [#allocation9], [#allocation9]
            %s342 = sphi %s8, %s8
          $region72: #{tpu_custom_call.1} parent=68 // loop_header_branch
            %339 = sbr.rel (%p337) target = $region76
          $region73: #{tpu_custom_call.1} parent=68 // loop_body
            %v343 = vld [vmem:[%s341] sm:%s334]
            %344 = vst [vmem:[%s342] sm:%s334] %v343
          $region74: #{tpu_custom_call.1} parent=68 // loop_footer
            %s340 = sadd.s32 1, %s336
          $region75: #{tpu_custom_call.1} parent=68 // loop_footer_branch
            %335 = sbr.rel target = $region71
          $region76: #{tpu_custom_call.1} parent=68 // loop_exit
            _
        $region69: #{tpu_custom_call.1} parent=60 // pred_fallthru
          _
      $region61: #{tpu_custom_call.1} parent=56 // pred_fallthru
        _
      %359 = vnop
    $region57: #{tpu_custom_call.1} parent=1 // pred_fallthru
      _
    // Predicated region
    $region88: #{tpu_custom_call.1} parent=1 // pred_check
      _
    $region89: #{tpu_custom_call.1} parent=1 // pred_check_branch
      %361 = sbr.rel (0) target = $region91
    $region90: #{tpu_custom_call.1} parent=1 // pred_region
      _
    $region91: #{tpu_custom_call.1} parent=1 // pred_fallthru
      _
    %362 = vsyncpa [#allocation5], 1
    %363 = vsyncpa [#allocation7], 1

</llo_original>
